<compile_context>
chip_gen: v7x
topology: tpu7x:2x2x1
jax: 0.10.0
libtpu: 0.0.40
codegen_flags: <defaults>
</compile_context>

<pallas_src>
import jax
import jax.numpy as jnp
from jax.experimental import pallas as pl
from jax.experimental.pallas import tpu as pltpu

_LANE = 128          # TPU lane width
_MAX_L = 1024        # lane-dense last dim for the streamed backward
_MAX_TM = 512        # rows per block -> (512, 1024) f32 = 2 MiB blocks


# ---------------------------------------------------------------------------
# Backward Pallas kernel: o = -coeff * g   (elementwise, mem-bound)
# ---------------------------------------------------------------------------
def _neg_scale_kernel(coeff_ref, g_ref, o_ref):
    # coeff is a single f32 scalar in SMEM; cast once, multiply tile in g dtype.
    neg_coeff = (-coeff_ref[0]).astype(o_ref.dtype)
    o_ref[...] = neg_coeff * g_ref[...]


def _neg_scale_pallas(coeff, g):
    """Compute -coeff * g with a tiled, pipelined Pallas kernel."""
    orig_shape = g.shape
    orig_dtype = g.dtype
    n = int(g.size)

    flat = g.reshape((-1,))

    # Lane-dense 2-D layout: last dim L is a multiple of 128.
    if n >= _MAX_L:
        L = _MAX_L
    else:
        L = _LANE * pl.cdiv(max(n, 1), _LANE)
    rows = pl.cdiv(n, L)
    TM = min(_MAX_TM, rows)
    rows_padded = pl.cdiv(rows, TM) * TM
    padded_n = rows_padded * L
    if padded_n != n:
        flat = jnp.pad(flat, (0, padded_n - n))
    g2d = flat.reshape((rows_padded, L))

    grid = (rows_padded // TM,)

    # coeff lives in SMEM as a 32-bit scalar.
    coeff_1d = jnp.asarray(coeff, dtype=jnp.float32).reshape((1,))

    # VMEM budget: (in + out) blocks, double-buffered, plus headroom.
    block_bytes = TM * L * jnp.dtype(orig_dtype).itemsize
    vmem_limit = min(2 * 2 * block_bytes + (4 << 20), 96 << 20)

    out2d = pl.pallas_call(
        _neg_scale_kernel,
        out_shape=jax.ShapeDtypeStruct(g2d.shape, g2d.dtype),
        grid=grid,
        in_specs=[
            pl.BlockSpec(memory_space=pltpu.SMEM),            # coeff scalar
            pl.BlockSpec((TM, L), lambda i: (i, 0)),           # gradient tile
        ],
        out_specs=pl.BlockSpec((TM, L), lambda i: (i, 0)),
        compiler_params=pltpu.CompilerParams(
            dimension_semantics=("parallel",),
            vmem_limit_bytes=int(vmem_limit),
        ),
    )(coeff_1d, g2d)

    return out2d.reshape((-1,))[:n].reshape(orig_shape)


# ---------------------------------------------------------------------------
# custom_vjp wiring (== GradientReverseLayer.apply)
# ---------------------------------------------------------------------------
@jax.custom_vjp
def gradient_reverse(x, coeff):
    # Forward of GradientReverseLayer is input.view_as(input): a pure no-op.
    return x


def _gr_fwd(x, coeff):
    # ctx.save_for_backward(coeff)
    return x, coeff


def _gr_bwd(coeff, g):
    dx = _neg_scale_pallas(coeff, g)
    # coeff gets no gradient in the PyTorch reference (returns None).
    return dx, jnp.zeros_like(jnp.asarray(coeff))


gradient_reverse.defvjp(_gr_fwd, _gr_bwd)


# ---------------------------------------------------------------------------
# Module wrapper (mirrors GradientReverseModule)
# ---------------------------------------------------------------------------
class GradientReverseModule:
    """Forward is identity; backward multiplies the gradient by -coeff."""

    def __init__(self):
        # No parameters in the original module.
        pass

    def __call__(self, x, coeff=1.0):
        # PyTorch builds coeff = torch.ones(1) * coeff on device.
        coeff_arr = jnp.asarray(coeff, dtype=jnp.float32)
        return gradient_reverse(x, coeff_arr)


# ---------------------------------------------------------------------------
# Demo / self-test
# ---------------------------------------------------------------------------
if __name__ == "__main__":
    key = jax.random.PRNGKey(0)
    x = jax.random.normal(key, (2, 4, 16, 16), dtype=jnp.float32)  # NCHW
    coeff = 0.5

    grl = GradientReverseModule()

    # Forward: must be identity.
    y = grl(x, coeff)
    y = jax.block_until_ready(y)
    assert y.shape == x.shape and y.dtype == x.dtype
    assert bool(jnp.allclose(y, x))

    # Backward: dL/dx must equal -coeff * dL/dy  (dL/dy = ones for sum loss).
    def loss(inp):
        return jnp.sum(grl(inp, coeff))

    dx = jax.block_until_ready(jax.grad(loss)(x))
    assert dx.shape == x.shape and dx.dtype == x.dtype
    assert bool(jnp.allclose(dx, -coeff * jnp.ones_like(x)))

    # Same check under jit (exercises the Pallas kernel inside a traced graph).
    dx_jit = jax.block_until_ready(jax.jit(jax.grad(loss))(x))
    assert bool(jnp.allclose(dx_jit, -coeff * jnp.ones_like(x)))

    # Weighted cotangent: grad of sum(w * y) wrt x must be -coeff * w.
    w = jax.random.normal(jax.random.PRNGKey(1), x.shape, dtype=jnp.float32)

    def loss_w(inp):
        return jnp.sum(w * grl(inp, coeff))

    dx_w = jax.block_until_ready(jax.grad(loss_w)(x))
    assert bool(jnp.allclose(dx_w, -coeff * w, atol=1e-6))

    print("KERNEL_OK")
</pallas_src>

<mosaic_0001>
module attributes {stable_mosaic.version = 11 : i64} {
  func.func @_neg_scale_kernel(%arg0: i32, %arg1: memref<1xf32, #tpu.memory_space<smem>>, %arg2: memref<2x1024xf32, #tpu.memory_space<vmem>>, %arg3: memref<2x1024xf32, #tpu.memory_space<vmem>>) attributes {dimension_semantics = [#tpu.dimension_semantics<parallel>], iteration_bounds = array<i64: 1>, scalar_prefetch = 0 : i64, scratch_operands = 0 : i64, tpu.core_type = #tpu.core_type<tc>, window_params = [{transform_indices = @transform_0, window_bounds = array<i64: 1>}, {transform_indices = @transform_1, window_bounds = array<i64: 2, 1024>}, {transform_indices = @transform_2, window_bounds = array<i64: 2, 1024>}]} {
    %c0 = arith.constant 0 : index
    %0 = memref.load %arg1[%c0] : memref<1xf32, #tpu.memory_space<smem>>
    %cst = arith.constant 0.000000e+00 : f32
    %1 = arith.subf %cst, %0 : f32
    %c0_0 = arith.constant 0 : index
    %c0_1 = arith.constant 0 : index
    %2 = vector.load %arg2[%c0_0, %c0_1] : memref<2x1024xf32, #tpu.memory_space<vmem>>, vector<2x1024xf32>
    %3 = vector.broadcast %1 : f32 to vector<2x1024xf32>
    %4 = arith.mulf %3, %2 : vector<2x1024xf32>
    %c0_2 = arith.constant 0 : index
    %c0_3 = arith.constant 0 : index
    %5 = vector.load %arg3[%c0_2, %c0_3] : memref<2x1024xf32, #tpu.memory_space<vmem>>, vector<2x1024xf32>
    tpu.vector_store %arg3[%c0_2, %c0_3], %4 {strides = array<i32>} : memref<2x1024xf32, #tpu.memory_space<vmem>>, vector<2x1024xf32>,
    return
  }
  func.func @transform_0(%arg0: i32) -> i32 {
    %c0_i32 = arith.constant 0 : i32
    %c0_i32_0 = arith.constant 0 : i32
    return %c0_i32 : i32
  }
  func.func @transform_1(%arg0: i32) -> (i32, i32) {
    %c0_i32 = arith.constant 0 : i32
    %c0_i32_0 = arith.constant 0 : i32
    return %arg0, %c0_i32 : i32, i32
  }
  func.func @transform_2(%arg0: i32) -> (i32, i32) {
    %c0_i32 = arith.constant 0 : i32
    %c0_i32_0 = arith.constant 0 : i32
    return %arg0, %c0_i32 : i32, i32
  }
}

</mosaic_0001>

<llo_original>
// kernel: tpu_custom_call.1
$region0: #{tpu_custom_call.1}
  #allocation0 [shape = 'u32[]', space=smem, size = 0x4, offset = 0x4, fixed_abs, tag = 'smem constant byte address 0x4 - core index']
  #allocation1 [shape = 'u32[144,128]{1,0:T(1,128)}', space=vmem, size = 0x12000, scoped, tag = 'internal scratch']
  #allocation2 [shape = 'f32[1]{0:T(128)S(6)}', space=smem, size = 0x200, scoped, tag = 'scoped memory for tpu_custom_call.1']
  %s0 = inlined_call_operand.<no memory space> [shape: f32[1], index: 0, kind: input, shape index: {}]
  %s1 = inlined_call_operand.hbm [shape: f32[2,1024], index: 1, kind: input, shape index: {}]
  %s2 = inlined_call_operand.hbm [shape: f32[2,1024], index: 2, kind: output, shape index: {}]
  %s3 = sld [smem:[#allocation0]]
  $region22: #{tpu_custom_call.1} parent=0
    _
  %s5 = ssub.s32 1, %s3
  %s6 = scalar_select 0, %s5, %s3
  %7 = sst [smem:[#allocation2]] %s0
  $region1: #{tpu_custom_call.1} parent=0
    #allocation3 [shape = 'u8[8192]{0}', space=vmem, size = 0x2000, scoped, tag = 'input window, operand 1, single buffered']
    #allocation4 [shape = 's32[1]{0}', space=sflag, size = 0x4, scoped, tag = 'scoped memory for tpu_custom_call.1']
    #allocation5 [shape = 's32[1]{0}', space=sflag, size = 0x4, scoped, tag = 'scoped memory for tpu_custom_call.1']
    #allocation6 [shape = 'u8[8192]{0}', space=vmem, size = 0x2000, scoped, tag = 'output window, operand 0, single buffered']
    %8 = vsyncpa [#allocation4], 0
    %9 = vsyncpa [#allocation5], 0
    // Predicated region
    $region2: #{tpu_custom_call.1} parent=1 // pred_check
      _
    $region3: #{tpu_custom_call.1} parent=1 // pred_check_branch
      %11 = sbr.rel (0) target = $region5
    $region4: #{tpu_custom_call.1} parent=1 // pred_region
      _
    $region5: #{tpu_custom_call.1} parent=1 // pred_fallthru
      _
    // Predicated region
    $region6: #{tpu_custom_call.1} parent=1 // pred_check
      _
    $region7: #{tpu_custom_call.1} parent=1 // pred_check_branch
      %13 = sbr.rel (0) target = $region9
    $region8: #{tpu_custom_call.1} parent=1 // pred_region
      %s15 = ssub.s32 256, 256
      %16 = vsyncadd [#allocation4], %s15
      %s18 = sshll.u32 [#allocation3], 4
      %s19 = int_to_ptr.vmem [resolvable:$true] %s18
      %21 = dma.hbm_to_vmem [thread:$0]  %s1, 256, %s19, [#allocation4]
    $region9: #{tpu_custom_call.1} parent=1 // pred_fallthru
      _
    // Predicated region
    $region10: #{tpu_custom_call.1} parent=1 // pred_check
      _
    $region11: #{tpu_custom_call.1} parent=1 // pred_check_branch
      %23 = sbr.rel (0) target = $region13
    $region12: #{tpu_custom_call.1} parent=1 // pred_region
      %24 = dma.done [#allocation4], 256
    $region13: #{tpu_custom_call.1} parent=1 // pred_fallthru
      _
    %s25 = sld [smem:[#allocation2]]
    %s26 = ssub.f32 0.0, %s25
    %v27 = vld [vmem:[#allocation3] sm:$0xff]
    %v28 = vld [vmem:[#allocation3 + $0x8] sm:$0xff]
    %v29 = vstv %s26
    %v30 = vmul.f32 %v29, %v27
    %v31 = vmul.f32 %v29, %v28
    %32 = vst [vmem:[#allocation6] sm:$0xff] %v30
    %33 = vst [vmem:[#allocation6 + $0x8] sm:$0xff] %v31
    // Predicated region
    $region14: #{tpu_custom_call.1} parent=1 // pred_check
      _
    $region15: #{tpu_custom_call.1} parent=1 // pred_check_branch
      %35 = sbr.rel (0) target = $region17
    $region16: #{tpu_custom_call.1} parent=1 // pred_region
      %s37 = ssub.s32 256, 256
      %38 = vsyncadd [#allocation5], %s37
      %s40 = sshll.u32 [#allocation6], 4
      %s41 = int_to_ptr.vmem [resolvable:$true] %s40
      %43 = dma.vmem_to_hbm [thread:$0]  %s41, 256, %s2, [#allocation5]
    $region17: #{tpu_custom_call.1} parent=1 // pred_fallthru
      _
    // Predicated region
    $region18: #{tpu_custom_call.1} parent=1 // pred_check
      _
    $region19: #{tpu_custom_call.1} parent=1 // pred_check_branch
      %45 = sbr.rel (0) target = $region21
    $region20: #{tpu_custom_call.1} parent=1 // pred_region
      %46 = dma.done [#allocation5], 256
    $region21: #{tpu_custom_call.1} parent=1 // pred_fallthru
      _
    %47 = vsyncpa [#allocation4], 1
    %48 = vsyncpa [#allocation5], 1

</llo_original>
